<compile_context>
chip_gen: v5e
topology: v5e:2x2
jax: 0.10.0
libtpu: 0.0.40
codegen_flags: <defaults>
</compile_context>

<pallas_src>
import functools
import math

import jax
import jax.numpy as jnp
from jax.experimental import pallas as pl
from jax.experimental.pallas import tpu as pltpu


_LANE = 128
_TM_MAX = 4096  # lane-tile over B*L; sized for v7x's smaller VMEM, fine on v5e/v6e.


def _round_up(a: int, b: int) -> int:
    return ((a + b - 1) // b) * b


def _encoder_kernel(w_ref, p_ref, o_ref, *, apply_relu: bool):
    # w_ref : (n_basis, C_in*K)   -- resident across the grid
    # p_ref : (C_in*K, TM)        -- one lane-dense tile of transposed patches
    # o_ref : (n_basis, TM)       -- lane-dense output tile
    acc = jnp.dot(w_ref[...], p_ref[...], preferred_element_type=jnp.float32)
    if apply_relu:
        acc = jnp.maximum(acc, 0.0)
    o_ref[...] = acc.astype(o_ref.dtype)


def encoder_forward(x, weight, *, stride: int, nonlinear=None, mxu_dtype=None):
    """Forward pass of Encoder.

    x:      (B, C_in, T)          float32
    weight: (n_basis, C_in, K)    float32  (Conv1d weight, bias=False)
    returns (B, n_basis, L) with L = (T - K)//stride + 1

    mxu_dtype: optional narrower dtype (e.g. jnp.bfloat16) for the MXU inputs
    on v6e/v7x; accumulation stays f32.  Default keeps full f32.
    """
    if nonlinear is not None and nonlinear != "relu":
        raise NotImplementedError("Not support {}".format(nonlinear))
    apply_relu = nonlinear == "relu"

    B, C_in, T = x.shape
    n_basis, C_in_w, K = weight.shape
    assert C_in == C_in_w
    L = (T - K) // stride + 1
    assert L >= 1

    M = B * L
    Kd = C_in * K
    N = n_basis

    # --- transposed im2col via strided slices (no gather) -------------------
    # cols[k][b, c, l] = x[b, c, l*stride + k]
    end = (L - 1) * stride + 1
    cols = [x[:, :, k:k + end:stride] for k in range(K)]
    pt = jnp.stack(cols, axis=0)                 # (K, B, C_in, L)
    pt = jnp.transpose(pt, (2, 0, 1, 3))         # (C_in, K, B, L)
    patches_t = pt.reshape(Kd, M)                # feature = c*K + k, col = b*L + l

    w_flat = weight.reshape(N, Kd)               # matches feature ordering c*K + k

    if mxu_dtype is not None:
        patches_t = patches_t.astype(mxu_dtype)
        w_flat = w_flat.astype(mxu_dtype)

    # --- tiling over the (lane) B*L axis -------------------------------------
    TM = min(_TM_MAX, _round_up(M, _LANE))
    M_pad = _round_up(M, TM)
    if M_pad != M:
        patches_t = jnp.pad(patches_t, ((0, 0), (0, M_pad - M)))
    num_tiles = M_pad // TM

    itemsize = 4
    cost = pl.CostEstimate(
        flops=2 * M_pad * Kd * N,
        transcendentals=0,
        bytes_accessed=itemsize * (M_pad * Kd + Kd * N + M_pad * N),
    )

    out_t = pl.pallas_call(
        functools.partial(_encoder_kernel, apply_relu=apply_relu),
        out_shape=jax.ShapeDtypeStruct((N, M_pad), x.dtype),
        grid=(num_tiles,),
        in_specs=[
            pl.BlockSpec((N, Kd), lambda i: (0, 0)),    # weight: resident in VMEM
            pl.BlockSpec((Kd, TM), lambda i: (0, i)),   # patches tile (lane-dense)
        ],
        out_specs=pl.BlockSpec((N, TM), lambda i: (0, i)),  # lane-dense output
        compiler_params=pltpu.CompilerParams(
            dimension_semantics=("parallel",),
            vmem_limit_bytes=32 * 1024 * 1024,
        ),
        cost_estimate=cost,
    )(w_flat, patches_t)

    # --- back to PyTorch layout (B, n_basis, L) -------------------------------
    out_t = out_t[:, :M].reshape(N, B, L)
    return jnp.transpose(out_t, (1, 0, 2))


def _reference_conv1d(x, weight, stride):
    # NCW conv via lax, for correctness checking only.
    return jax.lax.conv_general_dilated(
        x, weight, window_strides=(stride,), padding="VALID",
        dimension_numbers=("NCH", "OIH", "NCH"))


def _check(B, C_in, T, n_basis, K, stride, key):
    kx, kw = jax.random.split(key)
    x = jax.random.normal(kx, (B, C_in, T), dtype=jnp.float32)
    fan_in = C_in * K
    bound = 1.0 / math.sqrt(fan_in)
    weight = jax.random.uniform(kw, (n_basis, C_in, K), dtype=jnp.float32,
                                minval=-bound, maxval=bound)

    out = encoder_forward(x, weight, stride=stride, nonlinear="relu")
    out = jax.block_until_ready(out)

    ref = jnp.maximum(_reference_conv1d(x, weight, stride), 0.0)
    L = (T - K) // stride + 1
    assert out.shape == (B, n_basis, L), (out.shape, (B, n_basis, L))
    assert jnp.allclose(out, ref, atol=1e-5, rtol=1e-5), "mismatch vs reference"


if __name__ == "__main__":
    key = jax.random.PRNGKey(0)
    k_small, k_big = jax.random.split(key)

    # Small shapes consistent with the module's forward (single-tile path).
    _check(B=2, C_in=4, T=80, n_basis=32, K=16, stride=8, key=k_small)

    # Moderately longer sequence to exercise the multi-tile grid + padding path.
    _check(B=2, C_in=4, T=16400, n_basis=32, K=16, stride=8, key=k_big)

    print("KERNEL_OK")
</pallas_src>

<mosaic_0001>
module attributes {stable_mosaic.version = 11 : i64} {
  func.func @_encoder_kernel(%arg0: i32, %arg1: memref<32x64xf32, #tpu.memory_space<vmem>>, %arg2: memref<64x128xf32, #tpu.memory_space<vmem>>, %arg3: memref<32x128xf32, #tpu.memory_space<vmem>>) attributes {dimension_semantics = [#tpu.dimension_semantics<parallel>], iteration_bounds = array<i64: 1>, scalar_prefetch = 0 : i64, scratch_operands = 0 : i64, tpu.core_type = #tpu.core_type<tc>, window_params = [{pipeline_mode = #tpu.pipeline_mode<synchronous>, transform_indices = @transform_0, window_bounds = array<i64: 32, 64>}, {transform_indices = @transform_1, window_bounds = array<i64: 64, 128>}, {transform_indices = @transform_2, window_bounds = array<i64: 32, 128>}]} {
    %c0 = arith.constant 0 : index
    %c0_0 = arith.constant 0 : index
    %0 = vector.load %arg1[%c0, %c0_0] : memref<32x64xf32, #tpu.memory_space<vmem>>, vector<32x64xf32>
    %c0_1 = arith.constant 0 : index
    %c0_2 = arith.constant 0 : index
    %1 = vector.load %arg2[%c0_1, %c0_2] : memref<64x128xf32, #tpu.memory_space<vmem>>, vector<64x128xf32>
    %cst = arith.constant dense<0.000000e+00> : vector<32x128xf32>
    %2 = tpu.matmul %0, %1, %cst {dimension_numbers = #tpu.dot_dimension_numbers<[1], [0], [0], [1], [0, 0, 1, 1], [], []>} : vector<32x64xf32>, vector<64x128xf32>, vector<32x128xf32> -> vector<32x128xf32>
    %cst_3 = arith.constant 0.000000e+00 : f32
    %3 = vector.broadcast %cst_3 : f32 to vector<32x128xf32>
    %4 = arith.maximumf %2, %3 : vector<32x128xf32>
    %c0_4 = arith.constant 0 : index
    %c0_5 = arith.constant 0 : index
    %5 = vector.load %arg3[%c0_4, %c0_5] : memref<32x128xf32, #tpu.memory_space<vmem>>, vector<32x128xf32>
    tpu.vector_store %arg3[%c0_4, %c0_5], %4 {strides = array<i32>} : memref<32x128xf32, #tpu.memory_space<vmem>>, vector<32x128xf32>,
    return
  }
  func.func @transform_0(%arg0: i32) -> (i32, i32) {
    %c0_i32 = arith.constant 0 : i32
    %c0_i32_0 = arith.constant 0 : i32
    %c0_i32_1 = arith.constant 0 : i32
    return %c0_i32, %c0_i32_0 : i32, i32
  }
  func.func @transform_1(%arg0: i32) -> (i32, i32) {
    %c0_i32 = arith.constant 0 : i32
    %c0_i32_0 = arith.constant 0 : i32
    return %c0_i32, %arg0 : i32, i32
  }
  func.func @transform_2(%arg0: i32) -> (i32, i32) {
    %c0_i32 = arith.constant 0 : i32
    %c0_i32_0 = arith.constant 0 : i32
    return %c0_i32, %arg0 : i32, i32
  }
}

</mosaic_0001>

<llo_original>
// kernel: tpu_custom_call.1
$region0: #{tpu_custom_call.1}
  #allocation0 [shape = 'u32[]', space=smem, size = 0x4, offset = 0x4, fixed_abs, tag = 'smem constant byte address 0x4 - core index']
  #allocation1 [shape = 'u32[72,128]{1,0:T(1,128)}', space=vmem, size = 0x9000, scoped, tag = 'internal scratch']
  %s0 = inlined_call_operand.hbm [shape: f32[32,64], index: 0, kind: input, shape index: {}]
  %s1 = inlined_call_operand.hbm [shape: f32[64,128], index: 1, kind: input, shape index: {}]
  %s2 = inlined_call_operand.hbm [shape: f32[32,128], index: 2, kind: output, shape index: {}]
  %s3 = sld [smem:[#allocation0]]
  $region26: #{tpu_custom_call.1} parent=0
    _
  %s5 = ssub.s32 1, %s3
  %s6 = scalar_select 0, %s5, %s3
  $region1: #{tpu_custom_call.1} parent=0
    #allocation2 [shape = 'u8[16384]{0}', space=vmem, size = 0x4000, scoped, tag = 'input window, operand 0, single buffered']
    #allocation3 [shape = 's32[1]{0}', space=sflag, size = 0x4, scoped, tag = 'scoped memory for tpu_custom_call.1']
    #allocation4 [shape = 's32[1]{0}', space=sflag, size = 0x4, scoped, tag = 'scoped memory for tpu_custom_call.1']
    #allocation5 [shape = 'u8[32768]{0}', space=vmem, size = 0x8000, scoped, tag = 'input window, operand 1, single buffered']
    #allocation6 [shape = 's32[1]{0}', space=sflag, size = 0x4, scoped, tag = 'scoped memory for tpu_custom_call.1']
    #allocation7 [shape = 'u8[16384]{0}', space=vmem, size = 0x4000, scoped, tag = 'output window, operand 0, single buffered']
    %7 = vsyncpa [#allocation3], 0
    %8 = vsyncpa [#allocation6], 0
    %9 = vsyncpa [#allocation4], 0
    // Predicated region
    $region2: #{tpu_custom_call.1} parent=1 // pred_check
      _
    $region3: #{tpu_custom_call.1} parent=1 // pred_check_branch
      %11 = sbr.rel (0) target = $region5
    $region4: #{tpu_custom_call.1} parent=1 // pred_region
      %13 = vsyncadd [#allocation3], 0
      %s14 = sshll.u32 %s0, 4
      %s15 = int_to_ptr.hbm [resolvable:$true] %s14
      %s16 = sshll.u32 [#allocation2], 4
      %s17 = int_to_ptr.vmem [resolvable:$true] %s16
      %22 = dma.hbm_to_vmem [thread:$0]  %s15, 512, %s17, [#allocation3], 128, 128, 8
    $region5: #{tpu_custom_call.1} parent=1 // pred_fallthru
      _
    // Predicated region
    $region6: #{tpu_custom_call.1} parent=1 // pred_check
      _
    $region7: #{tpu_custom_call.1} parent=1 // pred_check_branch
      %24 = sbr.rel (0) target = $region9
    $region8: #{tpu_custom_call.1} parent=1 // pred_region
      %26 = vsyncadd [#allocation6], 0
      %s27 = sshll.u32 %s1, 4
      %s28 = int_to_ptr.hbm [resolvable:$true] %s27
      %s29 = sshll.u32 [#allocation5], 4
      %s30 = int_to_ptr.vmem [resolvable:$true] %s29
      %35 = dma.hbm_to_vmem [thread:$0]  %s28, 1024, %s30, [#allocation6], 128, 128, 8
    $region9: #{tpu_custom_call.1} parent=1 // pred_fallthru
      _
    // Predicated region
    $region10: #{tpu_custom_call.1} parent=1 // pred_check
      _
    $region11: #{tpu_custom_call.1} parent=1 // pred_check_branch
      %37 = sbr.rel (0) target = $region13
    $region12: #{tpu_custom_call.1} parent=1 // pred_region
      %39 = dma.done [#allocation3], 512
    $region13: #{tpu_custom_call.1} parent=1 // pred_fallthru
      _
    // Predicated region
    $region14: #{tpu_custom_call.1} parent=1 // pred_check
      _
    $region15: #{tpu_custom_call.1} parent=1 // pred_check_branch
      %41 = sbr.rel (0) target = $region17
    $region16: #{tpu_custom_call.1} parent=1 // pred_region
      %43 = dma.done [#allocation6], 1024
    $region17: #{tpu_custom_call.1} parent=1 // pred_fallthru
      _
    %v44 = vld [vmem:[#allocation2] sm:$0xff]
    %v45 = vld [vmem:[#allocation2 + $0x8] sm:$0xff]
    %v46 = vld [vmem:[#allocation2 + $0x10] sm:$0xff]
    %v47 = vld [vmem:[#allocation2 + $0x18] sm:$0xff]
    %v48 = vld [vmem:[#allocation5] sm:$0xff]
    %v49 = vld [vmem:[#allocation5 + $0x8] sm:$0xff]
    %v50 = vld [vmem:[#allocation5 + $0x10] sm:$0xff]
    %v51 = vld [vmem:[#allocation5 + $0x18] sm:$0xff]
    %v52 = vld [vmem:[#allocation5 + $0x20] sm:$0xff]
    %v53 = vld [vmem:[#allocation5 + $0x28] sm:$0xff]
    %v54 = vld [vmem:[#allocation5 + $0x30] sm:$0xff]
    %v55 = vld [vmem:[#allocation5 + $0x38] sm:$0xff]
    %vm56 = vcmask 523264
    %v58 = vsel %vm56, %v44, 0
    %v61 = vsel %vm56, %v45, 0
    %v64 = vsel %vm56, %v46, 0
    %v67 = vsel %vm56, %v47, 0
    %69 = vmatpush.msra.mxu0 0.0
    %70 = vmatpush.msra.mxu0 0.0
    %71 = vmatpush.msra.mxu0 0.0
    %72 = vmatpush.msra.mxu0 0.0
    %73 = vmatpush.msra.mxu0 0.0
    %74 = vmatpush.msra.mxu0 0.0
    %75 = vmatpush.msra.mxu0 0.0
    %76 = vmatpush.msra.mxu0 0.0
    %77 = vmatpush.msra.mxu0 %v55
    %78 = vmatpush.msra.mxu0 %v54
    %79 = vmatpush.msra.mxu0 %v53
    %80 = vmatpush.msra.mxu0 %v52
    %81 = vmatpush.msra.mxu0 %v51
    %82 = vmatpush.msra.mxu0 %v50
    %83 = vmatpush.msra.mxu0 %v49
    %84 = vmatpush.msra.mxu0 %v48
    %85 = vmatmul.f32.gmra.mxu0 %v58
    %v86 = vpop.f32.mrf.mxu0
    %v87 = vadd.f32 0.0, %v86
    %88 = vmatmul.f32.gmra.mxu0 %v61
    %v89 = vpop.f32.mrf.mxu0
    %v90 = vadd.f32 0.0, %v89
    %91 = vmatmul.f32.gmra.mxu0 %v64
    %v92 = vpop.f32.mrf.mxu0
    %v93 = vadd.f32 0.0, %v92
    %94 = vmatmul.f32.gmra.mxu0 %v67
    %v95 = vpop.f32.mrf.mxu0
    %v96 = vadd.f32 0.0, %v95
    %97 = vdwg.mxu0
    %v98 = vmax.f32 %v87, 0.0
    %v99 = vmax.f32 %v90, 0.0
    %v100 = vmax.f32 %v93, 0.0
    %v101 = vmax.f32 %v96, 0.0
    %102 = vst [vmem:[#allocation7] sm:$0xff] %v98
    %103 = vst [vmem:[#allocation7 + $0x8] sm:$0xff] %v99
    %104 = vst [vmem:[#allocation7 + $0x10] sm:$0xff] %v100
    %105 = vst [vmem:[#allocation7 + $0x18] sm:$0xff] %v101
    // Predicated region
    $region18: #{tpu_custom_call.1} parent=1 // pred_check
      _
    $region19: #{tpu_custom_call.1} parent=1 // pred_check_branch
      %107 = sbr.rel (0) target = $region21
    $region20: #{tpu_custom_call.1} parent=1 // pred_region
      %109 = vsyncadd [#allocation4], 0
      %s110 = sshll.u32 [#allocation7], 4
      %s111 = int_to_ptr.vmem [resolvable:$true] %s110
      %s112 = sshll.u32 %s2, 4
      %s113 = int_to_ptr.hbm [resolvable:$true] %s112
      %118 = dma.vmem_to_hbm [thread:$0]  %s111, 512, %s113, [#allocation4], 128, 128, 8
    $region21: #{tpu_custom_call.1} parent=1 // pred_fallthru
      _
    // Predicated region
    $region22: #{tpu_custom_call.1} parent=1 // pred_check
      _
    $region23: #{tpu_custom_call.1} parent=1 // pred_check_branch
      %120 = sbr.rel (0) target = $region25
    $region24: #{tpu_custom_call.1} parent=1 // pred_region
      %122 = dma.done [#allocation4], 512
    $region25: #{tpu_custom_call.1} parent=1 // pred_fallthru
      _
    %123 = vsyncpa [#allocation3], 1
    %124 = vsyncpa [#allocation6], 1
    %125 = vsyncpa [#allocation4], 1

</llo_original>
